<compile_context>
chip_gen: v6e
topology: v6e:2x2x1
jax: 0.10.0
libtpu: 0.0.40
codegen_flags: <defaults>
</compile_context>

<pallas_src>
import functools

import jax
import jax.numpy as jnp
from jax.experimental import pallas as pl
from jax.experimental.pallas import tpu as pltpu


def _tile(n, max_tile):
    """Largest convenient tile <= max_tile that divides n."""
    if n <= max_tile:
        return n
    for t in (512, 256, 128, 64, 32, 16, 8):
        if t <= max_tile and n % t == 0:
            return t
    return n  # fall back to a single (un-tiled) block


# --------------------------------------------------------------------------
# Kernel 1: fused per-head projection, computed once per token.
#   x_ref : (1, TL, F) bf16        w_ref : (F, F) bf16  (block-diag, pre-T)
#   out   : (1, H, TL, D) bf16     (head-major layout for the attention kernel)
# --------------------------------------------------------------------------
def _proj_kernel(x_ref, w_ref, out_ref, *, heads, head_dim):
    xp = jnp.dot(x_ref[0], w_ref[...],
                 preferred_element_type=jnp.float32).astype(jnp.bfloat16)   # (TL, F)
    # One-time relayout to head-major; happens once per token, not per q-tile.
    for h in range(heads):
        out_ref[0, h] = xp[:, h * head_dim:(h + 1) * head_dim]


def _project(x_bf16, w_bd, *, heads, head_dim):
    N, L, F = x_bf16.shape
    TL = _tile(L, 512)
    nl = L // TL
    kernel = functools.partial(_proj_kernel, heads=heads, head_dim=head_dim)
    grid_spec = pltpu.PrefetchScalarGridSpec(
        num_scalar_prefetch=0,
        grid=(N, nl),
        in_specs=[
            pl.BlockSpec((1, TL, F), lambda n, li: (n, li, 0)),
            pl.BlockSpec((F, F), lambda n, li: (0, 0)),
        ],
        out_specs=pl.BlockSpec((1, heads, TL, head_dim), lambda n, li: (n, 0, li, 0)),
    )
    return pl.pallas_call(
        kernel,
        out_shape=jax.ShapeDtypeStruct((N, heads, L, head_dim), jnp.bfloat16),
        grid_spec=grid_spec,
        compiler_params=pltpu.CompilerParams(
            dimension_semantics=("parallel", "parallel"),
            vmem_limit_bytes=32 * 1024 * 1024),
    )(x_bf16, w_bd)


# --------------------------------------------------------------------------
# Kernel 2: flash-style attention + fused output projection.
#   qp_ref   : (1, H, TQ, D) bf16     kp_ref/vp_ref : (1, H, TK, D) bf16
#   mask_ref : (1, H, TQ, TK) int8    wo_t_ref : (F, F) bf16   bo_ref : (1, F) f32
#   out_ref  : (1, TQ, F)
#   scratch  : m (H,TQ,1) f32, l (H,TQ,1) f32, acc (H,TQ,D) f32, o_buf (TQ,F) f32
# --------------------------------------------------------------------------
def _flash_attn_kernel(qp_ref, kp_ref, vp_ref, mask_ref, wo_t_ref, bo_ref,
                       out_ref, m_sc, l_sc, acc_sc, o_buf, *, heads, head_dim):
    ki = pl.program_id(2)

    @pl.when(ki == 0)
    def _():
        m_sc[...] = jnp.full_like(m_sc, -jnp.inf)
        l_sc[...] = jnp.zeros_like(l_sc)
        acc_sc[...] = jnp.zeros_like(acc_sc)

    q = qp_ref[0]                     # (H, TQ, D) bf16, scale folded into Wq
    k = kp_ref[0]                     # (H, TK, D) bf16
    v = vp_ref[0]                     # (H, TK, D) bf16

    # Single batched-over-heads contraction (no per-head lane slices).
    s = jnp.einsum('hqd,hkd->hqk', q, k,
                   preferred_element_type=jnp.float32)            # (H, TQ, TK)
    # int8 mask used directly -- no f32 cast / f32 temporary.
    s = jnp.where(mask_ref[0] == 0, jnp.float32(-1e20), s)

    # Online softmax (f32).
    m_prev = m_sc[...]
    m_new = jnp.maximum(m_prev, jnp.max(s, axis=-1, keepdims=True))   # (H,TQ,1)
    alpha = jnp.exp(m_prev - m_new)
    p = jnp.exp(s - m_new)                                            # (H,TQ,TK)
    l_sc[...] = alpha * l_sc[...] + jnp.sum(p, axis=-1, keepdims=True)
    acc_sc[...] = alpha * acc_sc[...] + jnp.einsum(
        'hqk,hkd->hqd', p.astype(jnp.bfloat16), v,
        preferred_element_type=jnp.float32)                           # (H,TQ,D)
    m_sc[...] = m_new

    @pl.when(ki == pl.num_programs(2) - 1)
    def _():
        # Assemble head outputs into one (TQ, F) buffer (f32, single bf16 cast
        # afterwards), then ONE K=F output-projection matmul (fused fc_out).
        inv_l = pl.reciprocal(l_sc[...], approx=True)                 # (H,TQ,1)
        for h in range(heads):
            o_buf[:, h * head_dim:(h + 1) * head_dim] = acc_sc[h] * inv_l[h]
        out_ref[0] = (jnp.dot(o_buf[...].astype(jnp.bfloat16), wo_t_ref[...],
                              preferred_element_type=jnp.float32)
                      + bo_ref[...]).astype(out_ref.dtype)


def self_attention(values, keys, query, mask, params, *, heads,
                   out_dtype=jnp.float32):
    """values/keys/query: (N, L, F) float32.  mask: (N, H, Lq, Lk) or None."""
    N, Lq, F = query.shape
    Lk = keys.shape[1]
    assert values.shape[1] == Lk, "attention contraction assumes key_len == value_len"
    head_dim = F // heads
    assert head_dim * heads == F, "feature_size must be divisible by heads"

    wv, wk, wq, wo, bo = params

    # Host-side weight preprocessing (free at kernel time):
    #  - block-diagonal layout: all heads project with one (L,F)@(F,F) matmul
    #  - pre-transposed (kernel never transposes weights)
    #  - softmax 1/sqrt(F) scale folded into the Q projection
    #  - bf16 MXU operands
    scale = 1.0 / (float(F) ** 0.5)
    eye = jnp.eye(heads, dtype=jnp.float32)
    wv_bd = jnp.kron(eye, wv.T).astype(jnp.bfloat16)               # (F, F)
    wk_bd = jnp.kron(eye, wk.T).astype(jnp.bfloat16)               # (F, F)
    wq_bd = (jnp.kron(eye, wq.T) * scale).astype(jnp.bfloat16)     # (F, F)
    wo_t = wo.T.astype(jnp.bfloat16)                               # (F, F)
    bo2 = bo.reshape(1, F).astype(jnp.float32)

    # Mask as int8: 4x less HBM->VMEM traffic than dense f32.
    if mask is None:
        mask_i8 = jnp.ones((N, heads, Lq, Lk), jnp.int8)
    else:
        mask_i8 = (mask != 0).astype(jnp.int8)

    v_b = values.astype(jnp.bfloat16)
    k_b = keys.astype(jnp.bfloat16)
    q_b = query.astype(jnp.bfloat16)

    # --- projections: once per token, bf16, head-major (N, H, L, D) ---------
    qp = _project(q_b, wq_bd, heads=heads, head_dim=head_dim)
    kp = _project(k_b, wk_bd, heads=heads, head_dim=head_dim)
    vp = _project(v_b, wv_bd, heads=heads, head_dim=head_dim)

    # --- flash-style attention + fused fc_out -------------------------------
    TQ = _tile(Lq, 256)     # larger q-tiles amortize per-step overhead (v5e/v6e)
    TK = _tile(Lk, 512)     # kv streamed in chunks: VMEM bounded independent of Lk
    nq = Lq // TQ
    nk = Lk // TK

    kernel = functools.partial(_flash_attn_kernel, heads=heads, head_dim=head_dim)

    grid_spec = pltpu.PrefetchScalarGridSpec(
        num_scalar_prefetch=0,
        grid=(N, nq, nk),
        in_specs=[
            pl.BlockSpec((1, heads, TQ, head_dim), lambda n, qi, ki: (n, 0, qi, 0)),  # Q
            pl.BlockSpec((1, heads, TK, head_dim), lambda n, qi, ki: (n, 0, ki, 0)),  # K
            pl.BlockSpec((1, heads, TK, head_dim), lambda n, qi, ki: (n, 0, ki, 0)),  # V
            pl.BlockSpec((1, heads, TQ, TK), lambda n, qi, ki: (n, 0, qi, ki)),       # mask
            pl.BlockSpec((F, F), lambda n, qi, ki: (0, 0)),                           # Wo^T
            pl.BlockSpec((1, F), lambda n, qi, ki: (0, 0)),                           # bo
        ],
        out_specs=pl.BlockSpec((1, TQ, F), lambda n, qi, ki: (n, qi, 0)),
        scratch_shapes=[
            pltpu.VMEM((heads, TQ, 1), jnp.float32),          # running max m
            pltpu.VMEM((heads, TQ, 1), jnp.float32),          # running denom l
            pltpu.VMEM((heads, TQ, head_dim), jnp.float32),   # running acc
            pltpu.VMEM((TQ, F), jnp.float32),                 # head-concat buffer
        ],
    )

    return pl.pallas_call(
        kernel,
        out_shape=jax.ShapeDtypeStruct((N, Lq, F), out_dtype),
        grid_spec=grid_spec,
        compiler_params=pltpu.CompilerParams(
            # batch & q-tile axes shard across TCs (v7x megacore); kv axis is
            # the online-softmax reduction -> "arbitrary".
            dimension_semantics=("parallel", "parallel", "arbitrary"),
            # <= 50% of v7x's 64 MiB physical VMEM; plenty for these tiles.
            vmem_limit_bytes=32 * 1024 * 1024),
    )(qp, kp, vp, mask_i8, wo_t, bo2)


def _reference(values, keys, query, mask, params, *, heads):
    """Pure-JAX (f32) replica of the PyTorch forward, for a sanity check."""
    wv, wk, wq, wo, bo = params
    N, Lq, F = query.shape
    D = F // heads
    v = values.reshape(N, -1, heads, D) @ wv.T
    k = keys.reshape(N, -1, heads, D) @ wk.T
    q = query.reshape(N, -1, heads, D) @ wq.T
    energy = jnp.einsum('nqhd,nkhd->nhqk', q, k)
    if mask is not None:
        energy = jnp.where(mask == 0.0, jnp.float32(-1e20), energy)
    attn = jax.nn.softmax(energy / (F ** 0.5), axis=3)
    out = jnp.einsum('nhql,nlhd->nqhd', attn, v).reshape(N, Lq, F)
    return out @ wo.T + bo


if __name__ == "__main__":
    # Small deterministic problem: batch=2, seq=8, feature_size=128, heads=4
    # (feature_size is a multiple of 128 so the output tile is lane-dense).
    N, L, F, H = 2, 8, 128, 4
    D = F // H

    key = jax.random.PRNGKey(0)
    k1, k2, k3, k4, k5, k6, k7, k8, k9 = jax.random.split(key, 9)

    values = jax.random.normal(k1, (N, L, F), jnp.float32)
    keys_in = jax.random.normal(k2, (N, L, F), jnp.float32)
    query = jax.random.normal(k3, (N, L, F), jnp.float32)

    # Deterministic parameters matching the nn.Linear shapes in __init__.
    wv = jax.random.normal(k4, (D, D), jnp.float32) * 0.1
    wk = jax.random.normal(k5, (D, D), jnp.float32) * 0.1
    wq = jax.random.normal(k6, (D, D), jnp.float32) * 0.1
    wo = jax.random.normal(k7, (F, F), jnp.float32) * 0.1
    bo = jax.random.normal(k8, (F,), jnp.float32) * 0.1
    params = (wv, wk, wq, wo, bo)

    # A mask with a few zeros (padding-style), shape (N, H, Lq, Lk).
    mask = (jax.random.uniform(k9, (N, H, L, L)) > 0.2).astype(jnp.float32)

    out = self_attention(values, keys_in, query, mask, params, heads=H)
    out = jax.block_until_ready(out)

    ref = _reference(values, keys_in, query, mask, params, heads=H)
    # Tolerance loosened vs. pure f32 because the kernel uses bf16 MXU operands
    # (f32 accumulation / f32 online softmax).
    assert jnp.allclose(out, ref, atol=5e-2, rtol=5e-2), "mismatch vs reference"

    print("KERNEL_OK")
</pallas_src>

<mosaic_0001>
module attributes {stable_mosaic.version = 11 : i64} {
  func.func @_proj_kernel(%arg0: i32, %arg1: i32, %arg2: memref<1x8x128xbf16, #tpu.memory_space<vmem>>, %arg3: memref<128x128xbf16, #tpu.memory_space<vmem>>, %arg4: memref<1x4x8x32xbf16, #tpu.memory_space<vmem>>) attributes {dimension_semantics = [#tpu.dimension_semantics<parallel>, #tpu.dimension_semantics<parallel>], iteration_bounds = array<i64: 2, 1>, scalar_prefetch = 0 : i64, scratch_operands = 0 : i64, tpu.core_type = #tpu.core_type<tc>, window_params = [{transform_indices = @transform_0, window_bounds = array<i64: 1, 8, 128>}, {pipeline_mode = #tpu.pipeline_mode<synchronous>, transform_indices = @transform_1, window_bounds = array<i64: 128, 128>}, {transform_indices = @transform_2, window_bounds = array<i64: 1, 4, 8, 32>}]} {
    %c0 = arith.constant 0 : index
    %c0_0 = arith.constant 0 : index
    %c0_1 = arith.constant 0 : index
    %0 = vector.load %arg2[%c0, %c0_0, %c0_1] : memref<1x8x128xbf16, #tpu.memory_space<vmem>>, vector<1x8x128xbf16>
    %1 = vector.shape_cast %0 : vector<1x8x128xbf16> to vector<8x128xbf16>
    %c0_2 = arith.constant 0 : index
    %c0_3 = arith.constant 0 : index
    %2 = vector.load %arg3[%c0_2, %c0_3] : memref<128x128xbf16, #tpu.memory_space<vmem>>, vector<128x128xbf16>
    %cst = arith.constant dense<0.000000e+00> : vector<8x128xf32>
    %3 = tpu.matmul %1, %2, %cst {dimension_numbers = #tpu.dot_dimension_numbers<[1], [0], [0], [1], [0, 0, 1, 1], [], []>} : vector<8x128xbf16>, vector<128x128xbf16>, vector<8x128xf32> -> vector<8x128xf32>
    %4 = arith.truncf %3 : vector<8x128xf32> to vector<8x128xbf16>
    %5 = vector.extract_strided_slice %4 {offsets = [0, 0], sizes = [8, 32], strides = [1, 1]} : vector<8x128xbf16> to vector<8x32xbf16>
    %c0_4 = arith.constant 0 : index
    %c0_5 = arith.constant 0 : index
    %c0_6 = arith.constant 0 : index
    %c0_7 = arith.constant 0 : index
    %6 = vector.load %arg4[%c0_4, %c0_5, %c0_6, %c0_7] : memref<1x4x8x32xbf16, #tpu.memory_space<vmem>>, vector<1x1x8x32xbf16>
    %7 = vector.shape_cast %6 : vector<1x1x8x32xbf16> to vector<8x32xbf16>
    %8 = vector.shape_cast %5 : vector<8x32xbf16> to vector<1x1x8x32xbf16>
    tpu.vector_store %arg4[%c0_4, %c0_5, %c0_6, %c0_7], %8 {strides = array<i32>} : memref<1x4x8x32xbf16, #tpu.memory_space<vmem>>, vector<1x1x8x32xbf16>,
    %9 = vector.extract_strided_slice %4 {offsets = [0, 32], sizes = [8, 32], strides = [1, 1]} : vector<8x128xbf16> to vector<8x32xbf16>
    %c0_8 = arith.constant 0 : index
    %c1 = arith.constant 1 : index
    %c0_9 = arith.constant 0 : index
    %c0_10 = arith.constant 0 : index
    %10 = vector.load %arg4[%c0_8, %c1, %c0_9, %c0_10] : memref<1x4x8x32xbf16, #tpu.memory_space<vmem>>, vector<1x1x8x32xbf16>
    %11 = vector.shape_cast %10 : vector<1x1x8x32xbf16> to vector<8x32xbf16>
    %12 = vector.shape_cast %9 : vector<8x32xbf16> to vector<1x1x8x32xbf16>
    tpu.vector_store %arg4[%c0_8, %c1, %c0_9, %c0_10], %12 {strides = array<i32>} : memref<1x4x8x32xbf16, #tpu.memory_space<vmem>>, vector<1x1x8x32xbf16>,
    %13 = vector.extract_strided_slice %4 {offsets = [0, 64], sizes = [8, 32], strides = [1, 1]} : vector<8x128xbf16> to vector<8x32xbf16>
    %c0_11 = arith.constant 0 : index
    %c2 = arith.constant 2 : index
    %c0_12 = arith.constant 0 : index
    %c0_13 = arith.constant 0 : index
    %14 = vector.load %arg4[%c0_11, %c2, %c0_12, %c0_13] : memref<1x4x8x32xbf16, #tpu.memory_space<vmem>>, vector<1x1x8x32xbf16>
    %15 = vector.shape_cast %14 : vector<1x1x8x32xbf16> to vector<8x32xbf16>
    %16 = vector.shape_cast %13 : vector<8x32xbf16> to vector<1x1x8x32xbf16>
    tpu.vector_store %arg4[%c0_11, %c2, %c0_12, %c0_13], %16 {strides = array<i32>} : memref<1x4x8x32xbf16, #tpu.memory_space<vmem>>, vector<1x1x8x32xbf16>,
    %17 = vector.extract_strided_slice %4 {offsets = [0, 96], sizes = [8, 32], strides = [1, 1]} : vector<8x128xbf16> to vector<8x32xbf16>
    %c0_14 = arith.constant 0 : index
    %c3 = arith.constant 3 : index
    %c0_15 = arith.constant 0 : index
    %c0_16 = arith.constant 0 : index
    %18 = vector.load %arg4[%c0_14, %c3, %c0_15, %c0_16] : memref<1x4x8x32xbf16, #tpu.memory_space<vmem>>, vector<1x1x8x32xbf16>
    %19 = vector.shape_cast %18 : vector<1x1x8x32xbf16> to vector<8x32xbf16>
    %20 = vector.shape_cast %17 : vector<8x32xbf16> to vector<1x1x8x32xbf16>
    tpu.vector_store %arg4[%c0_14, %c3, %c0_15, %c0_16], %20 {strides = array<i32>} : memref<1x4x8x32xbf16, #tpu.memory_space<vmem>>, vector<1x1x8x32xbf16>,
    return
  }
  func.func @transform_0(%arg0: i32, %arg1: i32) -> (i32, i32, i32) {
    %c0_i32 = arith.constant 0 : i32
    %c0_i32_0 = arith.constant 0 : i32
    return %arg0, %arg1, %c0_i32 : i32, i32, i32
  }
  func.func @transform_1(%arg0: i32, %arg1: i32) -> (i32, i32) {
    %c0_i32 = arith.constant 0 : i32
    %c0_i32_0 = arith.constant 0 : i32
    %c0_i32_1 = arith.constant 0 : i32
    return %c0_i32, %c0_i32_0 : i32, i32
  }
  func.func @transform_2(%arg0: i32, %arg1: i32) -> (i32, i32, i32, i32) {
    %c0_i32 = arith.constant 0 : i32
    %c0_i32_0 = arith.constant 0 : i32
    %c0_i32_1 = arith.constant 0 : i32
    return %arg0, %c0_i32, %arg1, %c0_i32_0 : i32, i32, i32, i32
  }
}

</mosaic_0001>

<llo_original>
// kernel: tpu_custom_call.1
$region0: #{tpu_custom_call.1}
  #allocation0 [shape = 'u32[]', space=smem, size = 0x4, offset = 0x4, fixed_abs, tag = 'smem constant byte address 0x4 - core index']
  #allocation1 [shape = 'u32[144,128]{1,0:T(1,128)}', space=vmem, size = 0x12000, scoped, tag = 'internal scratch']
  %s0 = inlined_call_operand.hbm [shape: bf16[2,8,128], index: 0, kind: input, shape index: {}]
  %s1 = inlined_call_operand.hbm [shape: bf16[128,128], index: 1, kind: input, shape index: {}]
  %s2 = inlined_call_operand.hbm [shape: bf16[2,4,8,32], index: 2, kind: output, shape index: {}]
  %s3 = sld [smem:[#allocation0]]
  $region49: #{tpu_custom_call.1} parent=0
    _
  %s5 = ssub.s32 1, %s3
  %s6 = scalar_select 0, %s5, %s3
  $region1: #{tpu_custom_call.1} parent=0
    #allocation2 [shape = 'u8[4096]{0}', space=vmem, size = 0x1000, scoped, tag = 'input window, operand 0']
    #allocation3 [shape = 's32[2]{0}', space=sflag, size = 0x8, scoped, tag = 'scoped memory for tpu_custom_call.1']
    #allocation4 [shape = 's32[2]{0}', space=sflag, size = 0x8, scoped, tag = 'scoped memory for tpu_custom_call.1']
    #allocation5 [shape = 'u8[32768]{0}', space=vmem, size = 0x8000, scoped, tag = 'input window, operand 1, single buffered']
    #allocation6 [shape = 's32[1]{0}', space=sflag, size = 0x4, scoped, tag = 'scoped memory for tpu_custom_call.1']
    #allocation7 [shape = 'u8[16384]{0}', space=vmem, size = 0x4000, scoped, tag = 'output window, operand 0']
    %7 = vsyncpa [#allocation3], 0
    %s8 = scalar_lea.sflag [#allocation3], 1
    %9 = vsyncpa %s8, 0
    %10 = vsyncpa [#allocation6], 0
    %11 = vsyncpa [#allocation4], 0
    %s12 = scalar_lea.sflag [#allocation4], 1
    %13 = vsyncpa %s12, 0
    loop: start=0, step=1, limit=4
    $region2: #{tpu_custom_call.1} parent=1 // loop_pre_header
      _
    $region3: #{tpu_custom_call.1} parent=1 // loop_header
      %s15 = sphi 0, %s19
      %p16 = scmp.ge.s32.totalorder %s15, 4
      %s22 = sphi 0, %s34
      %s23 = sphi 0, %s30
      %s24 = sphi 0, %s22
      %s25 = sphi 0, %s23
      %s26 = sphi 0, %s24
      %s27 = sphi 0, %s25
      %s39 = sphi 0, %s41
      %s42 = sphi 0, %s39
      %s43 = sphi 0, %s42
      %s59 = sphi 0, %s43
      %s63 = sphi 0, %s63
      %s65 = sphi 0, %s63
      %s66 = sphi 0, %s65
      %s80 = sphi 0, %s66
      %s88 = sphi 0, %s90
      %s91 = sphi 0, %s88
      %s92 = sphi 0, %s91
      %s108 = sphi 0, %s92
    $region4: #{tpu_custom_call.1} parent=1 // loop_header_branch
      %18 = sbr.rel (%p16) target = $region8
    $region5: #{tpu_custom_call.1} parent=1 // loop_body
      %s20 = ssub.s32 %s15, 1
      %s21 = ssub.s32 %s15, 2
      %s28 = sadd.s32 1, %s23
      %p29 = scmp.ge.s32.totalorder %s28, 1
      %s30 = scalar_select %p29, 0, %s28
      %s31 = sadd.s32 1, %s22
      %s32 = scalar_select %p29, %s31, %s22
      %p33 = scmp.ge.s32.totalorder %s32, 2
      %s34 = scalar_select %p33, 0, %s32
      %s35 = ssub.s32 %s22, %s34
      %s36 = ssub.s32 %s23, %s30
      %s37 = sor.u32 %s35, %s36
      %p38 = scmp.eq.s32.totalorder %s37, 0
      %s40 = sadd.s32 %s39, 1
      %s41 = scalar_select %p38, %s39, %s40
      %p44 = pneg %p38
      %p45 = scmp.eq.s32.totalorder %s15, 1
      %p46 = por %p44, %p45
      %p47 = scmp.ne.s32.totalorder %s39, %s42
      %p48 = scmp.eq.s32.totalorder %s15, 0
      %p49 = por %p47, %p48
      %p50 = scmp.ne.s32.totalorder %s39, %s42
      %p51 = scmp.eq.s32.totalorder %s20, 1
      %p52 = por %p50, %p51
      %p53 = scmp.ne.s32.totalorder %s42, %s43
      %p54 = scmp.eq.s32.totalorder %s20, 0
      %p55 = por %p53, %p54
      %p56 = scmp.ne.s32.totalorder %s42, %s43
      %p57 = scmp.eq.s32.totalorder %s21, 1
      %p58 = por %p56, %p57
      %p60 = scmp.ne.s32.totalorder %s43, %s59
      %p61 = scmp.eq.s32.totalorder %s21, 0
      %p62 = por %p60, %p61
      %s64 = sadd.s32 %s63, 1
      %p67 = scmp.eq.s32.totalorder %s15, 1
      %p68 = scmp.ne.s32.totalorder %s63, %s65
      %p69 = scmp.eq.s32.totalorder %s15, 0
      %p70 = por %p68, %p69
      %p71 = scmp.ne.s32.totalorder %s63, %s65
      %p72 = scmp.eq.s32.totalorder %s20, 1
      %p73 = por %p71, %p72
      %p74 = scmp.ne.s32.totalorder %s65, %s66
      %p75 = scmp.eq.s32.totalorder %s20, 0
      %p76 = por %p74, %p75
      %p77 = scmp.ne.s32.totalorder %s65, %s66
      %p78 = scmp.eq.s32.totalorder %s21, 1
      %p79 = por %p77, %p78
      %p81 = scmp.ne.s32.totalorder %s66, %s80
      %p82 = scmp.eq.s32.totalorder %s21, 0
      %p83 = por %p81, %p82
      %s84 = ssub.s32 %s22, %s34
      %s85 = ssub.s32 %s23, %s30
      %s86 = sor.u32 %s84, %s85
      %p87 = scmp.eq.s32.totalorder %s86, 0
      %s89 = sadd.s32 %s88, 1
      %s90 = scalar_select %p87, %s88, %s89
      %p93 = pneg %p87
      %p94 = scmp.eq.s32.totalorder %s15, 1
      %p95 = por %p93, %p94
      %p96 = scmp.ne.s32.totalorder %s88, %s91
      %p97 = scmp.eq.s32.totalorder %s15, 0
      %p98 = por %p96, %p97
      %p99 = scmp.ne.s32.totalorder %s88, %s91
      %p100 = scmp.eq.s32.totalorder %s20, 1
      %p101 = por %p99, %p100
      %p102 = scmp.ne.s32.totalorder %s91, %s92
      %p103 = scmp.eq.s32.totalorder %s20, 0
      %p104 = por %p102, %p103
      %p105 = scmp.ne.s32.totalorder %s91, %s92
      %p106 = scmp.eq.s32.totalorder %s21, 1
      %p107 = por %p105, %p106
      %p109 = scmp.ne.s32.totalorder %s92, %s108
      %p110 = scmp.eq.s32.totalorder %s21, 0
      %p111 = por %p109, %p110
      %p112 = scmp.le.s32.totalorder 1, %s15
      %p113 = scmp.lt.s32.totalorder %s15, 3
      %p114 = pnand %p112, %p113
      %p115 = pneg %p114
      // Predicated region
      $region9: #{tpu_custom_call.1} parent=5 // pred_check
        _
      $region10: #{tpu_custom_call.1} parent=5 // pred_check_branch
        %117 = sbr.rel (%p114) target = $region12
      $region11: #{tpu_custom_call.1} parent=5 // pred_region
        %s118 = ssub.s32 %s15, 1
        // Predicated region
        $region13: #{tpu_custom_call.1} parent=11 // pred_check
          %p119 = pneg %p76
        $region14: #{tpu_custom_call.1} parent=11 // pred_check_branch
          %121 = sbr.rel (%p119) target = $region16
        $region15: #{tpu_custom_call.1} parent=11 // pred_region
          %s123 = ssub.s32 1024, 1024
          %124 = vsyncadd [#allocation6], %s123
          %s125 = sshll.u32 [#allocation5], 4
          %s126 = int_to_ptr.vmem [resolvable:$true] %s125
          %131 = dma.hbm_to_vmem [thread:$0]  %s1, 1024, %s126, [#allocation6], 64, 64, 4
        $region16: #{tpu_custom_call.1} parent=11 // pred_fallthru
          _
      $region12: #{tpu_custom_call.1} parent=5 // pred_fallthru
        _
      %p132 = scmp.lt.s32.totalorder %s15, 2
      // Predicated region
      $region17: #{tpu_custom_call.1} parent=5 // pred_check
        %p133 = pneg %p132
      $region18: #{tpu_custom_call.1} parent=5 // pred_check_branch
        %135 = sbr.rel (%p133) target = $region20
      $region19: #{tpu_custom_call.1} parent=5 // pred_region
        // Predicated region
        $region21: #{tpu_custom_call.1} parent=19 // pred_check
          %p136 = pneg %p49
        $region22: #{tpu_custom_call.1} parent=19 // pred_check_branch
          %138 = sbr.rel (%p136) target = $region24
        $region23: #{tpu_custom_call.1} parent=19 // pred_region
          %s139 = sand.u32 %s39, 1
          %s140 = scalar_lea.sflag [#allocation3], %s139
          %s141 = sand.u32 %s39, 1
          %s142 = smul.addr %s141, 4
          %s143 = scalar_lea.vmem [#allocation2], %s142
          %s145 = ssub.s32 64, 64
          %146 = vsyncadd %s140, %s145
          %s147 = sadd.s32 %s23, %s22
          %s148 = smul.addr %s147, 64
          %s149 = scalar_lea.hbm %s0, %s148
          %s151 = sshll.u32 %s143, 4
          %s152 = int_to_ptr.vmem [resolvable:$true] %s151
          %154 = dma.hbm_to_vmem [thread:$0]  %s149, 64, %s152, %s140
        $region24: #{tpu_custom_call.1} parent=19 // pred_fallthru
          _
      $region20: #{tpu_custom_call.1} parent=5 // pred_fallthru
        _
      %p155 = scmp.le.s32.totalorder 1, %s15
      %p156 = scmp.lt.s32.totalorder %s15, 3
      %p157 = pnand %p155, %p156
      %p158 = pneg %p157
      // Predicated region
      $region25: #{tpu_custom_call.1} parent=5 // pred_check
        _
      $region26: #{tpu_custom_call.1} parent=5 // pred_check_branch
        %160 = sbr.rel (%p157) target = $region28
      $region27: #{tpu_custom_call.1} parent=5 // pred_region
        %s161 = ssub.s32 %s15, 1
        %s162 = sand.u32 %s42, 1
        %s163 = scalar_lea.sflag [#allocation3], %s162
        %s164 = sand.u32 %s42, 1
        %s165 = smul.addr %s164, 4
        %s166 = scalar_lea.vmem [#allocation2], %s165
        // Predicated region
        $region29: #{tpu_custom_call.1} parent=27 // pred_check
          %p167 = pneg %p55
        $region30: #{tpu_custom_call.1} parent=27 // pred_check_branch
          %169 = sbr.rel (%p167) target = $region32
        $region31: #{tpu_custom_call.1} parent=27 // pred_region
          %170 = dma.done %s163, 64
        $region32: #{tpu_custom_call.1} parent=27 // pred_fallthru
          _
        // Predicated region
        $region33: #{tpu_custom_call.1} parent=27 // pred_check
          %p171 = pneg %p76
        $region34: #{tpu_custom_call.1} parent=27 // pred_check_branch
          %173 = sbr.rel (%p171) target = $region36
        $region35: #{tpu_custom_call.1} parent=27 // pred_region
          %174 = dma.done [#allocation6], 1024
        $region36: #{tpu_custom_call.1} parent=27 // pred_fallthru
          _
        %s175 = sand.u32 %s42, 1
        %s176 = scalar_lea.sflag [#allocation3], %s175
        %s177 = sand.u32 %s42, 1
        %s178 = smul.addr %s177, 4
        %s179 = scalar_lea.vmem [#allocation2], %s178
        %p180 = pneg %p55
        %p181 = pneg %p52
        %p182 = pneg %p76
        %p183 = pneg %p73
        %p184 = pneg %p104
        %p185 = pneg %p101
        %s186 = sand.u32 %s91, 1
        %s187 = scalar_lea.sflag [#allocation4], %s186
        %s188 = sand.u32 %s91, 1
        %s189 = smul.addr %s188, 16
        %s190 = scalar_lea.vmem [#allocation7], %s189
        %v192 = vld [vmem:[%s166] sm:$0xf]
        %v193 = vld [vmem:[#allocation5] sm:$0xf]
        %v194 = vld [vmem:[#allocation5 + $0x4] sm:$0xf]
        %v195 = vld [vmem:[#allocation5 + $0x8] sm:$0xf]
        %v196 = vld [vmem:[#allocation5 + $0xc] sm:$0xf]
        %v197 = vld [vmem:[#allocation5 + $0x10] sm:$0xf]
        %v198 = vld [vmem:[#allocation5 + $0x14] sm:$0xf]
        %v199 = vld [vmem:[#allocation5 + $0x18] sm:$0xf]
        %v200 = vld [vmem:[#allocation5 + $0x1c] sm:$0xf]
        %v201 = vld [vmem:[#allocation5 + $0x20] sm:$0xf]
        %v202 = vld [vmem:[#allocation5 + $0x24] sm:$0xf]
        %v203 = vld [vmem:[#allocation5 + $0x28] sm:$0xf]
        %v204 = vld [vmem:[#allocation5 + $0x2c] sm:$0xf]
        %v205 = vld [vmem:[#allocation5 + $0x30] sm:$0xf]
        %v206 = vld [vmem:[#allocation5 + $0x34] sm:$0xf]
        %v207 = vld [vmem:[#allocation5 + $0x38] sm:$0xf]
        %v208 = vld [vmem:[#allocation5 + $0x3c] sm:$0xf]
        %v225 = vunpack.c.l.b16 %v193
        %v226 = vunpack.c.l.b16 %v194
        %v227 = vunpack.c.l.b16 %v195
        %v228 = vunpack.c.l.b16 %v196
        %v229 = vunpack.c.l.b16 %v197
        %v230 = vunpack.c.l.b16 %v198
        %v231 = vunpack.c.l.b16 %v199
        %v232 = vunpack.c.l.b16 %v200
        %v233 = vunpack.c.l.b16 %v201
        %v234 = vunpack.c.l.b16 %v202
        %v235 = vunpack.c.l.b16 %v203
        %v236 = vunpack.c.l.b16 %v204
        %v237 = vunpack.c.l.b16 %v205
        %v238 = vunpack.c.l.b16 %v206
        %v239 = vunpack.c.l.b16 %v207
        %v240 = vunpack.c.l.b16 %v208
        %v241 = vpack.c.b16 %v226, %v225
        %v242 = vpack.c.b16 %v228, %v227
        %v243 = vpack.c.b16 %v230, %v229
        %v244 = vpack.c.b16 %v232, %v231
        %v245 = vpack.c.b16 %v234, %v233
        %v246 = vpack.c.b16 %v236, %v235
        %v247 = vpack.c.b16 %v238, %v237
        %v248 = vpack.c.b16 %v240, %v239
        %257 = vmatprep.subr.bf16.mxu0 0
        %258 = vmatpush1.bf16.msra.mxu0 %v248
        %259 = vmatprep.subr.bf16.mxu0 0
        %260 = vmatpush1.bf16.msra.mxu0 %v247
        %261 = vmatprep.subr.bf16.mxu0 0
        %262 = vmatpush1.bf16.msra.mxu0 %v246
        %263 = vmatprep.subr.bf16.mxu0 0
        %264 = vmatpush1.bf16.msra.mxu0 %v245
        %265 = vmatprep.subr.bf16.mxu0 0
        %266 = vmatpush1.bf16.msra.mxu0 %v244
        %267 = vmatprep.subr.bf16.mxu0 0
        %268 = vmatpush1.bf16.msra.mxu0 %v243
        %269 = vmatprep.subr.bf16.mxu0 0
        %270 = vmatpush1.bf16.msra.mxu0 %v242
        %271 = vmatprep.subr.bf16.mxu0 0
        %272 = vmatpush1.bf16.msra.mxu0 %v241
        %273 = vmatprep.subr.bf16.mxu0 0
        %274 = vmatpush2.bf16.msra.mxu0 0
        %275 = vmatprep.subr.bf16.mxu0 0
        %276 = vmatpush2.bf16.msra.mxu0 0
        %277 = vmatprep.subr.bf16.mxu0 0
        %278 = vmatpush2.bf16.msra.mxu0 0
        %279 = vmatprep.subr.bf16.mxu0 0
        %280 = vmatpush2.bf16.msra.mxu0 0
        %281 = vmatprep.subr.bf16.mxu0 0
        %282 = vmatpush2.bf16.msra.mxu0 0
        %283 = vmatprep.subr.bf16.mxu0 0
        %284 = vmatpush2.bf16.msra.mxu0 0
        %285 = vmatprep.subr.bf16.mxu0 0
        %286 = vmatpush2.bf16.msra.mxu0 0
        %287 = vmatprep.subr.bf16.mxu0 0
        %288 = vmatpush2.bf16.msra.mxu0 0
        %289 = vmatprep.mubr.bf16.mxu0 0
        %290 = vmatmul.mubr.bf16.gmra.mxu0 %v192
        %v291 = vpop.f32.mrf.mxu0
        %v292 = vadd.f32 0.0, %v291
        %v293 = vpop.f32.mrf.mxu0
        %v294 = vpop.f32.mrf.mxu0
        %v295 = vpop.f32.mrf.mxu0
        %296 = vdwg.mxu0
        %v297 = vpack.c.bf16 %v292, %v292
        %vm298 = vcmask 257024
        %299 = vst.msk [vmem:[%s190] sm:$0xf] %vm298, %v297
        %v301 = vunpack.c.l.b16 %v297
        %v302 = vpack.c.b16 %v301, %v301
        %303 = vrot.lane.b32.xlu0 %v302, 96
        %v304 = vpop.permute.xlu0 %303
        %s306 = scalar_lea.vmem %s190, 4 [#allocation7]
        %307 = vst.msk [vmem:[%s306] sm:$0xf] %vm298, %v304
        %308 = vrot.lane.b32.xlu0 %v302, 64
        %v309 = vpop.permute.xlu0 %308
        %s311 = scalar_lea.vmem %s190, 8 [#allocation7]
        %312 = vst.msk [vmem:[%s311] sm:$0xf] %vm298, %v309
        %313 = vrot.lane.b32.xlu0 %v302, 32
        %v314 = vpop.permute.xlu0 %313
        %s316 = scalar_lea.vmem %s190, 12 [#allocation7]
        %317 = vst.msk [vmem:[%s316] sm:$0xf] %vm298, %v314
        %s318 = sand.u32 %s91, 1
        %s319 = scalar_lea.sflag [#allocation4], %s318
        %s320 = sand.u32 %s91, 1
        %s321 = smul.addr %s320, 16
        %s322 = scalar_lea.vmem [#allocation7], %s321
        // Predicated region
        $region37: #{tpu_custom_call.1} parent=27 // pred_check
          %p323 = pneg %p101
        $region38: #{tpu_custom_call.1} parent=27 // pred_check_branch
          %325 = sbr.rel (%p323) target = $region40
        $region39: #{tpu_custom_call.1} parent=27 // pred_region
          %s327 = ssub.s32 256, 256
          %328 = vsyncadd %s319, %s327
          %s329 = smul.addr %s24, 4
          %s330 = sadd.s32 %s25, %s329
          %s331 = smul.addr %s330, 64
          %s332 = scalar_lea.hbm %s2, %s331
          %s333 = sshll.u32 %s322, 4
          %s334 = int_to_ptr.vmem [resolvable:$true] %s333
          %339 = dma.vmem_to_hbm [thread:$0]  %s334, 256, %s332, %s319, 64, 64, 4
        $region40: #{tpu_custom_call.1} parent=27 // pred_fallthru
          _
      $region28: #{tpu_custom_call.1} parent=5 // pred_fallthru
        _
      %p340 = scmp.le.s32.totalorder 2, %s15
      // Predicated region
      $region41: #{tpu_custom_call.1} parent=5 // pred_check
        %p341 = pneg %p340
      $region42: #{tpu_custom_call.1} parent=5 // pred_check_branch
        %343 = sbr.rel (%p341) target = $region44
      $region43: #{tpu_custom_call.1} parent=5 // pred_region
        %s344 = ssub.s32 %s15, 2
        // Predicated region
        $region45: #{tpu_custom_call.1} parent=43 // pred_check
          %p345 = pneg %p107
        $region46: #{tpu_custom_call.1} parent=43 // pred_check_branch
          %347 = sbr.rel (%p345) target = $region48
        $region47: #{tpu_custom_call.1} parent=43 // pred_region
          %s348 = sand.u32 %s92, 1
          %s349 = scalar_lea.sflag [#allocation4], %s348
          %s350 = sand.u32 %s92, 1
          %s351 = smul.addr %s350, 16
          %s352 = scalar_lea.vmem [#allocation7], %s351
          %353 = dma.done %s349, 256
        $region48: #{tpu_custom_call.1} parent=43 // pred_fallthru
          _
      $region44: #{tpu_custom_call.1} parent=5 // pred_fallthru
        _
    $region6: #{tpu_custom_call.1} parent=1 // loop_footer
      %s19 = sadd.s32 1, %s15
    $region7: #{tpu_custom_call.1} parent=1 // loop_footer_branch
      %14 = sbr.rel target = $region3
    $region8: #{tpu_custom_call.1} parent=1 // loop_exit
      _
    %354 = vsyncpa [#allocation3], 1
    %s355 = scalar_lea.sflag [#allocation3], 1
    %356 = vsyncpa %s355, 1
    %357 = vsyncpa [#allocation6], 1
    %358 = vsyncpa [#allocation4], 1
    %s359 = scalar_lea.sflag [#allocation4], 1
    %360 = vsyncpa %s359, 1

</llo_original>
